<compile_context>
chip_gen: v6e
topology: v6e:2x2x1
jax: 0.10.0
libtpu: 0.0.40
codegen_flags: <defaults>
</compile_context>

<pallas_src>
import functools
import math

import jax
import jax.numpy as jnp
from jax import lax
from jax.experimental import pallas as pl
from jax.experimental.pallas import tpu as pltpu


def _consistency_kernel(probs_ref, partial_ref, p_sum_ref, sq_sum_ref, *,
                        inv_temperature, s_total, n_total, use_sqrt,
                        ts, tn, cs, n_ragged):
    ni = pl.program_id(0)            # N-tile index ("parallel")
    sj = pl.program_id(1)            # S-tile index (reduction, "arbitrary")
    ns = pl.num_programs(1)

    @pl.when(sj == 0)
    def _init():
        p_sum_ref[...] = jnp.zeros_like(p_sum_ref)
        sq_sum_ref[...] = jnp.zeros_like(sq_sum_ref)

    # ---- hot loop: accumulate sum_s p and sum_s p^2 in <=cs-row chunks -----
    # The per-chunk f32 upcast is bounded at cs*tn*C*4 bytes, so a bf16 input
    # block is never duplicated in f32 at full block size; convert + add/FMA
    # stay in the VPU slots and hide under the input DMA.
    def accumulate(chunk_native):
        chunk = chunk_native.astype(jnp.float32)            # (rows, tn, C)
        p_sum_ref[...] += jnp.sum(chunk, axis=0)             # sum_s p
        sq_sum_ref[...] += jnp.sum(chunk * chunk, axis=0)    # sum_s p^2

    num_chunks = ts // cs
    if num_chunks == 1:
        accumulate(probs_ref[...])
    else:
        def body(ci, carry):
            start = pl.multiple_of(ci * cs, cs)
            accumulate(probs_ref[pl.ds(start, cs)])
            return carry
        lax.fori_loop(0, num_chunks, body, 0, unroll=(num_chunks <= 8))

    # ---- finalize: sharpen + renorm + partial loss for this N tile ---------
    @pl.when(sj == ns - 1)
    def _finalize():
        p_sum = p_sum_ref[...]                               # (tn, C) f32
        sq_sum = sq_sum_ref[...]
        if n_ragged:
            # Rows past N in the last (padded) N tile hold undefined data from
            # the block padding; drop them with selects (no NaN propagation).
            valid_n = n_total - ni * tn
            row_ok = lax.broadcasted_iota(jnp.int32, p_sum.shape, 0) < valid_n
            p_sum = jnp.where(row_ok, p_sum, 0.0)
            sq_sum = jnp.where(row_ok, sq_sum, 0.0)

        avg = p_sum * (1.0 / s_total)                        # mean over true S

        # sharpen: avg ** (1/T).  T == 2 -> sqrt (EUP); else exp/log (EUP).
        if use_sqrt:
            sharp = jnp.sqrt(avg)
        else:
            # exp((1/T) * log(0)) == 0, matching 0 ** (1/T) for T > 0.
            sharp = jnp.exp(inv_temperature * jnp.log(avg))

        row_sum = jnp.sum(sharp, axis=-1, keepdims=True)     # (tn, 1)
        # A genuinely all-zero row gives inf/NaN here, matching torch 0**x / 0.
        sharp = sharp * pl.reciprocal(row_sum, approx=False)
        if n_ragged:
            # Padded rows computed 0 * inf above; select them away.
            sharp = jnp.where(row_ok, sharp, 0.0)

        # Unnormalized sum over (S, this N tile, C) of (sharp - p)^2 via the
        # expanded identity.  NOTE: mild cancellation when sharp ~= p and S is
        # huge; f32-accumulated, acceptable for regularizer magnitudes.
        part = (float(s_total) * jnp.sum(sharp * sharp)
                - 2.0 * jnp.sum(sharp * p_sum)
                + jnp.sum(sq_sum))

        # Lane-dense single store per N tile; wrapper reads [:, 0, 0].
        partial_ref[...] = jnp.full(partial_ref.shape, part, dtype=jnp.float32)


def _round_up(x, m):
    return ((x + m - 1) // m) * m


def _round_down(x, m):
    return (x // m) * m


def _sublane_multiple(dtype):
    # Native packed sublane granularity: f32 -> 8 rows, bf16 -> 16, int8 -> 32.
    return {4: 8, 2: 16, 1: 32}.get(jnp.dtype(dtype).itemsize, 8)


def _vmem_capacity_bytes():
    try:
        return int(pltpu.get_tpu_info().vmem_capacity_bytes)
    except Exception:
        return 64 * 1024 * 1024            # conservative (v7x per-core VMEM)


def _pick_block_n(n, c, s, dtype):
    """Rows per N tile: dtype-aligned, >=2 tiles when possible (v7x megacore),
    capped so the f32 accumulators and per-chunk upcast temps stay small."""
    sub = _sublane_multiple(dtype)
    if n <= sub:
        return n                           # full dim is always a legal block dim
    chunk_rows = min(8, max(1, s))
    cap = min((2 * 1024 * 1024) // (4 * c * chunk_rows),   # f32 chunk <= ~2 MiB
              (2 * 1024 * 1024) // (4 * c))                # each f32 acc <= 2 MiB
    cap = max(sub, _round_down(cap, sub))
    two_tiles = _round_up(-(-n // 2), sub)  # prefer >= 2 N tiles for 2-TC chips
    tn = max(sub, min(two_tiles, cap))
    return n if tn >= n else tn


def _pick_block_s(s, tn, c, itemsize, vmem_bytes):
    """Sample rows per block: fill a <=16 MiB input block (double-buffered)
    within ~3/4 of VMEM; multiple of 8 so the kernel chunks evenly."""
    if s <= 8:
        return s
    acc_bytes = 2 * tn * c * 4
    budget = min(16 * 1024 * 1024,
                 max(1024 * 1024, (vmem_bytes * 3 // 4 - acc_bytes) // 2))
    rows = max(8, budget // max(1, tn * c * itemsize))
    return max(8, _round_down(min(rows, s), 8))


def consistency_regularizer(probs, temperature=2.0, factor=1.0,
                            block_s=None, block_n=None):
    """Returns the scalar consistency loss (what the PyTorch forward returns)."""
    assert probs.ndim >= 2, "probs must have at least 2 dims"
    C = probs.shape[-1]
    N = probs.shape[-2]
    S = 1
    for d in probs.shape[:-2]:
        S *= d

    # Flattening the leading dims == the repeated .mean(0) in the while-loop.
    # Keep the native dtype (bf16 stays bf16); the kernel upcasts per chunk.
    probs3 = jnp.reshape(probs, (S, N, C))
    itemsize = jnp.dtype(probs3.dtype).itemsize
    vmem_bytes = _vmem_capacity_bytes()

    tn = int(block_n) if block_n is not None else _pick_block_n(N, C, S, probs3.dtype)
    tn = min(tn, N)
    ts = int(block_s) if block_s is not None else _pick_block_s(S, tn, C, itemsize,
                                                                vmem_bytes)
    ts = min(ts, S)

    # Ragged S: prefer a multiple-of-8 divisor of S near ts (no extra copy);
    # otherwise zero-pad S up to a multiple of ts -- zero rows are exact no-ops
    # for both accumulators because the kernel divides by the true S.
    s_padded = S
    if S % ts != 0:
        if block_s is None and ts > 8:
            cand = _round_down(ts, 8)
            while cand >= max(8, ts // 2):
                if S % cand == 0:
                    ts = cand
                    break
                cand -= 8
        if S % ts != 0:
            s_padded = _round_up(S, ts)
            probs3 = jnp.pad(probs3, ((0, s_padded - S), (0, 0), (0, 0)))

    num_n_tiles = -(-N // tn)
    num_s_tiles = s_padded // ts
    n_ragged = (N % tn) != 0
    cs = ts if ts <= 8 else math.gcd(ts, 8)   # in-kernel chunk rows

    kernel = functools.partial(
        _consistency_kernel,
        inv_temperature=1.0 / float(temperature),
        s_total=S,
        n_total=N,
        use_sqrt=(float(temperature) == 2.0),
        ts=ts, tn=tn, cs=cs, n_ragged=n_ragged,
    )

    # Actual VMEM footprint: 2x double-buffered input block + 2 f32 accumulators
    # + per-chunk f32 temp + output block, plus slack.  Keeps v5e from
    # over-reserving and stays well inside v7x's 64 MiB physical VMEM.
    block_bytes = ts * tn * C * itemsize
    vmem_need = (2 * block_bytes + 2 * tn * C * 4 + cs * tn * C * 4
                 + 2 * 8 * 128 * 4 + 4 * 1024 * 1024)
    vmem_limit = int(min(max(24 * 1024 * 1024, vmem_need),
                         max(32 * 1024 * 1024, vmem_bytes - 8 * 1024 * 1024)))

    partials = pl.pallas_call(
        kernel,
        out_shape=jax.ShapeDtypeStruct((num_n_tiles, 8, 128), jnp.float32),
        grid_spec=pltpu.PrefetchScalarGridSpec(
            num_scalar_prefetch=0,
            grid=(num_n_tiles, num_s_tiles),          # reduction axis (S) last
            in_specs=[pl.BlockSpec((ts, tn, C), lambda i, j: (j, i, 0))],
            out_specs=pl.BlockSpec((1, 8, 128), lambda i, j: (i, 0, 0)),
            scratch_shapes=[pltpu.VMEM((tn, C), jnp.float32),   # sum_s p
                            pltpu.VMEM((tn, C), jnp.float32)],  # sum_s p^2
        ),
        compiler_params=pltpu.CompilerParams(
            # N-tile axis parallel (megacore / v7x two TensorCores); S axis is
            # the sequential streaming reduction.
            dimension_semantics=("parallel", "arbitrary"),
            vmem_limit_bytes=vmem_limit,
        ),
    )(probs3)

    loss = jnp.sum(partials[:, 0, 0]) * (1.0 / (S * N * C))

    # TODO(synk): pyro.factor('consistency_regularizer', -loss * factor) is a
    # Pyro-trace side effect with no JAX/Pallas equivalent; the PyTorch
    # forward() returns the unscaled loss, which is what we compute here.
    del factor
    return loss


def _reference(probs, temperature):
    avg = probs
    while avg.ndim > 2:
        avg = avg.mean(0)
    sharp = avg ** (1.0 / temperature)
    sharp = sharp / sharp.sum(-1, keepdims=True)
    return jnp.mean((sharp - probs) ** 2)


if __name__ == "__main__":
    key = jax.random.PRNGKey(0)
    k1, k2, k3 = jax.random.split(key, 3)

    # Case 1: (S=32, N=16, C=128) f32, T=2.0, forced tiles -> grid (2, 2),
    # two 8-row chunks per block (multi-chunk fori path), sqrt sharpening.
    logits1 = jax.random.normal(k1, (32, 16, 128), dtype=jnp.float32)
    probs1 = jax.nn.softmax(logits1, axis=-1)
    loss1 = jax.block_until_ready(
        consistency_regularizer(probs1, temperature=2.0, factor=1.0,
                                block_s=16, block_n=8))
    ref1 = _reference(probs1, 2.0)
    assert jnp.allclose(loss1, ref1, rtol=1e-5, atol=1e-6), (loss1, ref1)

    # Case 2: 4-D bf16 (2, 4, 16, 128), T=3.0, auto tiling -> native-dtype
    # streaming (per-chunk upcast) and the exp/log sharpening path.
    logits2 = jax.random.normal(k2, (2, 4, 16, 128), dtype=jnp.float32)
    probs2 = jax.nn.softmax(logits2, axis=-1).astype(jnp.bfloat16)
    loss2 = jax.block_until_ready(
        consistency_regularizer(probs2, temperature=3.0, factor=0.5))
    ref2 = _reference(probs2.astype(jnp.float32), 3.0)
    assert jnp.allclose(loss2, ref2, rtol=1e-5, atol=1e-6), (loss2, ref2)

    # Case 3: plain 2-D input (16, 128) -> S == 1 (the while-loop never runs).
    probs3 = probs1[0]
    loss3 = jax.block_until_ready(
        consistency_regularizer(probs3, temperature=2.0, factor=1.0))
    ref3 = _reference(probs3, 2.0)
    assert jnp.allclose(loss3, ref3, rtol=1e-5, atol=1e-6), (loss3, ref3)

    # Case 4: ragged shapes (S=10, N=20, C=64) f32 -> exercises the zero-pad
    # of S (10 -> 16) and the masked last N tile (20 -> two 16-row tiles).
    logits4 = jax.random.normal(k3, (10, 20, 64), dtype=jnp.float32)
    probs4 = jax.nn.softmax(logits4, axis=-1)
    loss4 = jax.block_until_ready(
        consistency_regularizer(probs4, temperature=2.0, factor=1.0))
    ref4 = _reference(probs4, 2.0)
    assert jnp.allclose(loss4, ref4, rtol=1e-5, atol=1e-6), (loss4, ref4)

    print("KERNEL_OK")
</pallas_src>

<mosaic_0001>
module attributes {stable_mosaic.version = 11 : i64} {
  func.func @_consistency_kernel(%arg0: i32, %arg1: i32, %arg2: memref<16x8x128xf32, #tpu.memory_space<vmem>>, %arg3: memref<1x8x128xf32, #tpu.memory_space<vmem>>, %arg4: memref<8x128xf32, #tpu.memory_space<vmem>>, %arg5: memref<8x128xf32, #tpu.memory_space<vmem>>) attributes {dimension_semantics = [#tpu.dimension_semantics<parallel>, #tpu.dimension_semantics<arbitrary>], iteration_bounds = array<i64: 2, 2>, scalar_prefetch = 0 : i64, scratch_operands = 2 : i64, tpu.core_type = #tpu.core_type<tc>, window_params = [{transform_indices = @transform_0, window_bounds = array<i64: 16, 8, 128>}, {transform_indices = @transform_1, window_bounds = array<i64: 1, 8, 128>}]} {
    %c0_i32 = arith.constant 0 : i32
    %0 = arith.cmpi eq, %arg1, %c0_i32 : i32
    %1 = arith.extui %0 : i1 to i32
    %c0_i32_0 = arith.constant 0 : i32
    %2 = arith.cmpi ne, %1, %c0_i32_0 : i32
    scf.if %2 {
      %cst_27 = arith.constant 0.000000e+00 : f32
      %32 = vector.broadcast %cst_27 : f32 to vector<8x128xf32>
      %c0_28 = arith.constant 0 : index
      %c0_29 = arith.constant 0 : index
      %33 = vector.load %arg4[%c0_28, %c0_29] : memref<8x128xf32, #tpu.memory_space<vmem>>, vector<8x128xf32>
      tpu.vector_store %arg4[%c0_28, %c0_29], %32 {strides = array<i32>} : memref<8x128xf32, #tpu.memory_space<vmem>>, vector<8x128xf32>,
      %cst_30 = arith.constant 0.000000e+00 : f32
      %34 = vector.broadcast %cst_30 : f32 to vector<8x128xf32>
      %c0_31 = arith.constant 0 : index
      %c0_32 = arith.constant 0 : index
      %35 = vector.load %arg5[%c0_31, %c0_32] : memref<8x128xf32, #tpu.memory_space<vmem>>, vector<8x128xf32>
      tpu.vector_store %arg5[%c0_31, %c0_32], %34 {strides = array<i32>} : memref<8x128xf32, #tpu.memory_space<vmem>>, vector<8x128xf32>,
    } else {
    }
    %c0_i32_1 = arith.constant 0 : i32
    %c8_i32 = arith.constant 8 : i32
    %3 = arith.muli %c0_i32_1, %c8_i32 : i32
    %4 = tpu.assume_multiple %3, 8 : i32
    %5 = arith.index_cast %4 : i32 to index
    %c0 = arith.constant 0 : index
    %c0_2 = arith.constant 0 : index
    %6 = vector.load %arg2[%5, %c0, %c0_2] : memref<16x8x128xf32, #tpu.memory_space<vmem>>, vector<8x8x128xf32>
    %c0_3 = arith.constant 0 : index
    %c0_4 = arith.constant 0 : index
    %7 = vector.load %arg4[%c0_3, %c0_4] : memref<8x128xf32, #tpu.memory_space<vmem>>, vector<8x128xf32>
    %cst = arith.constant dense<0.000000e+00> : vector<8x128xf32>
    %8 = vector.multi_reduction <add>, %6, %cst [0] : vector<8x8x128xf32> to vector<8x128xf32>
    %9 = arith.addf %7, %8 : vector<8x128xf32>
    %c0_5 = arith.constant 0 : index
    %c0_6 = arith.constant 0 : index
    %10 = vector.load %arg4[%c0_5, %c0_6] : memref<8x128xf32, #tpu.memory_space<vmem>>, vector<8x128xf32>
    tpu.vector_store %arg4[%c0_5, %c0_6], %9 {strides = array<i32>} : memref<8x128xf32, #tpu.memory_space<vmem>>, vector<8x128xf32>,
    %c0_7 = arith.constant 0 : index
    %c0_8 = arith.constant 0 : index
    %11 = vector.load %arg5[%c0_7, %c0_8] : memref<8x128xf32, #tpu.memory_space<vmem>>, vector<8x128xf32>
    %12 = arith.mulf %6, %6 : vector<8x8x128xf32>
    %cst_9 = arith.constant dense<0.000000e+00> : vector<8x128xf32>
    %13 = vector.multi_reduction <add>, %12, %cst_9 [0] : vector<8x8x128xf32> to vector<8x128xf32>
    %14 = arith.addf %11, %13 : vector<8x128xf32>
    %c0_10 = arith.constant 0 : index
    %c0_11 = arith.constant 0 : index
    %15 = vector.load %arg5[%c0_10, %c0_11] : memref<8x128xf32, #tpu.memory_space<vmem>>, vector<8x128xf32>
    tpu.vector_store %arg5[%c0_10, %c0_11], %14 {strides = array<i32>} : memref<8x128xf32, #tpu.memory_space<vmem>>, vector<8x128xf32>,
    %c1_i32 = arith.constant 1 : i32
    %c8_i32_12 = arith.constant 8 : i32
    %16 = arith.muli %c1_i32, %c8_i32_12 : i32
    %17 = tpu.assume_multiple %16, 8 : i32
    %18 = arith.index_cast %17 : i32 to index
    %c0_13 = arith.constant 0 : index
    %c0_14 = arith.constant 0 : index
    %19 = vector.load %arg2[%18, %c0_13, %c0_14] : memref<16x8x128xf32, #tpu.memory_space<vmem>>, vector<8x8x128xf32>
    %c0_15 = arith.constant 0 : index
    %c0_16 = arith.constant 0 : index
    %20 = vector.load %arg4[%c0_15, %c0_16] : memref<8x128xf32, #tpu.memory_space<vmem>>, vector<8x128xf32>
    %cst_17 = arith.constant dense<0.000000e+00> : vector<8x128xf32>
    %21 = vector.multi_reduction <add>, %19, %cst_17 [0] : vector<8x8x128xf32> to vector<8x128xf32>
    %22 = arith.addf %20, %21 : vector<8x128xf32>
    %c0_18 = arith.constant 0 : index
    %c0_19 = arith.constant 0 : index
    %23 = vector.load %arg4[%c0_18, %c0_19] : memref<8x128xf32, #tpu.memory_space<vmem>>, vector<8x128xf32>
    tpu.vector_store %arg4[%c0_18, %c0_19], %22 {strides = array<i32>} : memref<8x128xf32, #tpu.memory_space<vmem>>, vector<8x128xf32>,
    %c0_20 = arith.constant 0 : index
    %c0_21 = arith.constant 0 : index
    %24 = vector.load %arg5[%c0_20, %c0_21] : memref<8x128xf32, #tpu.memory_space<vmem>>, vector<8x128xf32>
    %25 = arith.mulf %19, %19 : vector<8x8x128xf32>
    %cst_22 = arith.constant dense<0.000000e+00> : vector<8x128xf32>
    %26 = vector.multi_reduction <add>, %25, %cst_22 [0] : vector<8x8x128xf32> to vector<8x128xf32>
    %27 = arith.addf %24, %26 : vector<8x128xf32>
    %c0_23 = arith.constant 0 : index
    %c0_24 = arith.constant 0 : index
    %28 = vector.load %arg5[%c0_23, %c0_24] : memref<8x128xf32, #tpu.memory_space<vmem>>, vector<8x128xf32>
    tpu.vector_store %arg5[%c0_23, %c0_24], %27 {strides = array<i32>} : memref<8x128xf32, #tpu.memory_space<vmem>>, vector<8x128xf32>,
    %c2_i32 = arith.constant 2 : i32
    %c1_i32_25 = arith.constant 1 : i32
    %29 = arith.cmpi eq, %arg1, %c1_i32_25 : i32
    %30 = arith.extui %29 : i1 to i32
    %c0_i32_26 = arith.constant 0 : i32
    %31 = arith.cmpi ne, %30, %c0_i32_26 : i32
    scf.if %31 {
      %c0_27 = arith.constant 0 : index
      %c0_28 = arith.constant 0 : index
      %32 = vector.load %arg4[%c0_27, %c0_28] : memref<8x128xf32, #tpu.memory_space<vmem>>, vector<8x128xf32>
      %c0_29 = arith.constant 0 : index
      %c0_30 = arith.constant 0 : index
      %33 = vector.load %arg5[%c0_29, %c0_30] : memref<8x128xf32, #tpu.memory_space<vmem>>, vector<8x128xf32>
      %cst_31 = arith.constant 3.125000e-02 : f32
      %34 = vector.broadcast %cst_31 : f32 to vector<8x128xf32>
      %35 = arith.mulf %32, %34 : vector<8x128xf32>
      %36 = math.sqrt %35 : vector<8x128xf32>
      %cst_32 = arith.constant dense<0.000000e+00> : vector<8xf32>
      %37 = vector.multi_reduction <add>, %36, %cst_32 [1] : vector<8x128xf32> to vector<8xf32>
      %38 = vector.shape_cast %37 : vector<8xf32> to vector<8x1xf32>
      %39 = tpu.reciprocal %38 : vector<8x1xf32> -> vector<8x1xf32>
      %40 = vector.broadcast %39 : vector<8x1xf32> to vector<8x128xf32>
      %41 = arith.mulf %36, %40 : vector<8x128xf32>
      %42 = arith.mulf %41, %41 : vector<8x128xf32>
      %43 = vector.shape_cast %42 : vector<8x128xf32> to vector<1x8x128xf32>
      %cst_33 = arith.constant dense<0.000000e+00> : vector<1xf32>
      %44 = vector.multi_reduction <add>, %43, %cst_33 [1, 2] : vector<1x8x128xf32> to vector<1xf32>
      %45 = vector.shape_cast %44 : vector<1xf32> to vector<1x1x1xf32>
      %46 = vector.extract %45[0, 0, 0] : f32 from vector<1x1x1xf32>
      %cst_34 = arith.constant 3.200000e+01 : f32
      %47 = arith.mulf %cst_34, %46 : f32
      %48 = arith.mulf %41, %32 : vector<8x128xf32>
      %49 = vector.shape_cast %48 : vector<8x128xf32> to vector<1x8x128xf32>
      %cst_35 = arith.constant dense<0.000000e+00> : vector<1xf32>
      %50 = vector.multi_reduction <add>, %49, %cst_35 [1, 2] : vector<1x8x128xf32> to vector<1xf32>
      %51 = vector.shape_cast %50 : vector<1xf32> to vector<1x1x1xf32>
      %52 = vector.extract %51[0, 0, 0] : f32 from vector<1x1x1xf32>
      %cst_36 = arith.constant 2.000000e+00 : f32
      %53 = arith.mulf %cst_36, %52 : f32
      %54 = arith.subf %47, %53 : f32
      %55 = vector.shape_cast %33 : vector<8x128xf32> to vector<1x8x128xf32>
      %cst_37 = arith.constant dense<0.000000e+00> : vector<1xf32>
      %56 = vector.multi_reduction <add>, %55, %cst_37 [1, 2] : vector<1x8x128xf32> to vector<1xf32>
      %57 = vector.shape_cast %56 : vector<1xf32> to vector<1x1x1xf32>
      %58 = vector.extract %57[0, 0, 0] : f32 from vector<1x1x1xf32>
      %59 = arith.addf %54, %58 : f32
      %60 = vector.broadcast %59 : f32 to vector<1x8x128xf32>
      %c0_38 = arith.constant 0 : index
      %c0_39 = arith.constant 0 : index
      %c0_40 = arith.constant 0 : index
      %61 = vector.load %arg3[%c0_38, %c0_39, %c0_40] : memref<1x8x128xf32, #tpu.memory_space<vmem>>, vector<1x8x128xf32>
      tpu.vector_store %arg3[%c0_38, %c0_39, %c0_40], %60 {strides = array<i32>} : memref<1x8x128xf32, #tpu.memory_space<vmem>>, vector<1x8x128xf32>,
    } else {
    }
    return
  }
  func.func @transform_0(%arg0: i32, %arg1: i32) -> (i32, i32, i32) {
    %c0_i32 = arith.constant 0 : i32
    %c0_i32_0 = arith.constant 0 : i32
    return %arg1, %arg0, %c0_i32 : i32, i32, i32
  }
  func.func @transform_1(%arg0: i32, %arg1: i32) -> (i32, i32, i32) {
    %c0_i32 = arith.constant 0 : i32
    %c0_i32_0 = arith.constant 0 : i32
    %c0_i32_1 = arith.constant 0 : i32
    return %arg0, %c0_i32, %c0_i32_0 : i32, i32, i32
  }
}

</mosaic_0001>

<llo_original>
// kernel: tpu_custom_call.1
$region0: #{tpu_custom_call.1}
  #allocation0 [shape = 'u32[]', space=smem, size = 0x4, offset = 0x4, fixed_abs, tag = 'smem constant byte address 0x4 - core index']
  #allocation1 [shape = 'u32[144,128]{1,0:T(1,128)}', space=vmem, size = 0x12000, scoped, tag = 'internal scratch']
  #allocation2 [shape = 'f32[8,128]{1,0:T(8,128)}', space=vmem, size = 0x1000, scoped, tag = 'scratch operand']
  #allocation3 [shape = 'f32[8,128]{1,0:T(8,128)}', space=vmem, size = 0x1000, scoped, tag = 'scratch operand']
  %s0 = inlined_call_operand.hbm [shape: f32[32,16,128], index: 0, kind: input, shape index: {}]
  %s1 = inlined_call_operand.hbm [shape: f32[2,8,128], index: 1, kind: output, shape index: {}]
  %s2 = sld [smem:[#allocation0]]
  $region49: #{tpu_custom_call.1} parent=0
    _
  %s4 = ssub.s32 1, %s2
  %s5 = scalar_select 0, %s4, %s2
  $region1: #{tpu_custom_call.1} parent=0
    #allocation4 [shape = 'u8[131072]{0}', space=vmem, size = 0x20000, scoped, tag = 'input window, operand 0']
    #allocation5 [shape = 's32[2]{0}', space=sflag, size = 0x8, scoped, tag = 'scoped memory for tpu_custom_call.1']
    #allocation6 [shape = 's32[2]{0}', space=sflag, size = 0x8, scoped, tag = 'scoped memory for tpu_custom_call.1']
    #allocation7 [shape = 'u8[8192]{0}', space=vmem, size = 0x2000, scoped, tag = 'output window, operand 0']
    %6 = vsyncpa [#allocation5], 0
    %s7 = scalar_lea.sflag [#allocation5], 1
    %8 = vsyncpa %s7, 0
    %9 = vsyncpa [#allocation6], 0
    %s10 = scalar_lea.sflag [#allocation6], 1
    %11 = vsyncpa %s10, 0
    loop: start=0, step=1, limit=6
    $region2: #{tpu_custom_call.1} parent=1 // loop_pre_header
      _
    $region3: #{tpu_custom_call.1} parent=1 // loop_header
      %s13 = sphi 0, %s17
      %p14 = scmp.ge.s32.totalorder %s13, 6
      %s20 = sphi 0, %s32
      %s21 = sphi 0, %s28
      %s22 = sphi 0, %s20
      %s23 = sphi 0, %s21
      %s24 = sphi 0, %s22
      %s25 = sphi 0, %s23
      %s37 = sphi 0, %s39
      %s40 = sphi 0, %s37
      %s41 = sphi 0, %s40
      %s57 = sphi 0, %s41
      %s63 = sphi 0, %s65
      %s66 = sphi 0, %s63
      %s67 = sphi 0, %s66
      %s83 = sphi 0, %s67
    $region4: #{tpu_custom_call.1} parent=1 // loop_header_branch
      %16 = sbr.rel (%p14) target = $region8
    $region5: #{tpu_custom_call.1} parent=1 // loop_body
      %s18 = ssub.s32 %s13, 1
      %s19 = ssub.s32 %s13, 2
      %s26 = sadd.s32 1, %s21
      %p27 = scmp.ge.s32.totalorder %s26, 2
      %s28 = scalar_select %p27, 0, %s26
      %s29 = sadd.s32 1, %s20
      %s30 = scalar_select %p27, %s29, %s20
      %p31 = scmp.ge.s32.totalorder %s30, 2
      %s32 = scalar_select %p31, 0, %s30
      %s33 = ssub.s32 %s21, %s28
      %s34 = ssub.s32 %s20, %s32
      %s35 = sor.u32 %s33, %s34
      %p36 = scmp.eq.s32.totalorder %s35, 0
      %s38 = sadd.s32 %s37, 1
      %s39 = scalar_select %p36, %s37, %s38
      %p42 = pneg %p36
      %p43 = scmp.eq.s32.totalorder %s13, 3
      %p44 = por %p42, %p43
      %p45 = scmp.ne.s32.totalorder %s37, %s40
      %p46 = scmp.eq.s32.totalorder %s13, 0
      %p47 = por %p45, %p46
      %p48 = scmp.ne.s32.totalorder %s37, %s40
      %p49 = scmp.eq.s32.totalorder %s18, 3
      %p50 = por %p48, %p49
      %p51 = scmp.ne.s32.totalorder %s40, %s41
      %p52 = scmp.eq.s32.totalorder %s18, 0
      %p53 = por %p51, %p52
      %p54 = scmp.ne.s32.totalorder %s40, %s41
      %p55 = scmp.eq.s32.totalorder %s19, 3
      %p56 = por %p54, %p55
      %p58 = scmp.ne.s32.totalorder %s41, %s57
      %p59 = scmp.eq.s32.totalorder %s19, 0
      %p60 = por %p58, %p59
      %s61 = ssub.s32 %s20, %s32
      %p62 = scmp.eq.s32.totalorder %s61, 0
      %s64 = sadd.s32 %s63, 1
      %s65 = scalar_select %p62, %s63, %s64
      %p68 = pneg %p62
      %p69 = scmp.eq.s32.totalorder %s13, 3
      %p70 = por %p68, %p69
      %p71 = scmp.ne.s32.totalorder %s63, %s66
      %p72 = scmp.eq.s32.totalorder %s13, 0
      %p73 = por %p71, %p72
      %p74 = scmp.ne.s32.totalorder %s63, %s66
      %p75 = scmp.eq.s32.totalorder %s18, 3
      %p76 = por %p74, %p75
      %p77 = scmp.ne.s32.totalorder %s66, %s67
      %p78 = scmp.eq.s32.totalorder %s18, 0
      %p79 = por %p77, %p78
      %p80 = scmp.ne.s32.totalorder %s66, %s67
      %p81 = scmp.eq.s32.totalorder %s19, 3
      %p82 = por %p80, %p81
      %p84 = scmp.ne.s32.totalorder %s67, %s83
      %p85 = scmp.eq.s32.totalorder %s19, 0
      %p86 = por %p84, %p85
      %p87 = scmp.le.s32.totalorder 1, %s13
      %p88 = scmp.lt.s32.totalorder %s13, 5
      %p89 = pnand %p87, %p88
      %p90 = pneg %p89
      // Predicated region
      $region9: #{tpu_custom_call.1} parent=5 // pred_check
        _
      $region10: #{tpu_custom_call.1} parent=5 // pred_check_branch
        %92 = sbr.rel (%p89) target = $region12
      $region11: #{tpu_custom_call.1} parent=5 // pred_region
        %s93 = ssub.s32 %s13, 1
      $region12: #{tpu_custom_call.1} parent=5 // pred_fallthru
        _
      %p94 = scmp.lt.s32.totalorder %s13, 4
      // Predicated region
      $region13: #{tpu_custom_call.1} parent=5 // pred_check
        %p95 = pneg %p94
      $region14: #{tpu_custom_call.1} parent=5 // pred_check_branch
        %97 = sbr.rel (%p95) target = $region16
      $region15: #{tpu_custom_call.1} parent=5 // pred_region
        // Predicated region
        $region17: #{tpu_custom_call.1} parent=15 // pred_check
          %p98 = pneg %p47
        $region18: #{tpu_custom_call.1} parent=15 // pred_check_branch
          %100 = sbr.rel (%p98) target = $region20
        $region19: #{tpu_custom_call.1} parent=15 // pred_region
          %s101 = sand.u32 %s37, 1
          %s102 = scalar_lea.sflag [#allocation5], %s101
          %s103 = sand.u32 %s37, 1
          %s104 = smul.addr %s103, 128
          %s105 = scalar_lea.vmem [#allocation4], %s104
          %s106 = smul.u32 16, %s21
          %s108 = ssub.s32 2048, 2048
          %109 = vsyncadd %s102, %s108
          %s110 = smul.addr %s106, 2
          %s111 = sadd.s32 %s20, %s110
          %s112 = smul.addr %s111, 128
          %s113 = scalar_lea.hbm %s0, %s112
          %s114 = sshll.u32 %s105, 4
          %s115 = int_to_ptr.vmem [resolvable:$true] %s114
          %120 = dma.hbm_to_vmem [thread:$0]  %s113, 2048, %s115, %s102, 256, 128, 8
        $region20: #{tpu_custom_call.1} parent=15 // pred_fallthru
          _
      $region16: #{tpu_custom_call.1} parent=5 // pred_fallthru
        _
      %p121 = scmp.le.s32.totalorder 1, %s13
      %p122 = scmp.lt.s32.totalorder %s13, 5
      %p123 = pnand %p121, %p122
      %p124 = pneg %p123
      // Predicated region
      $region21: #{tpu_custom_call.1} parent=5 // pred_check
        _
      $region22: #{tpu_custom_call.1} parent=5 // pred_check_branch
        %126 = sbr.rel (%p123) target = $region24
      $region23: #{tpu_custom_call.1} parent=5 // pred_region
        %s127 = ssub.s32 %s13, 1
        %s128 = sand.u32 %s40, 1
        %s129 = scalar_lea.sflag [#allocation5], %s128
        %s130 = sand.u32 %s40, 1
        %s131 = smul.addr %s130, 128
        %s132 = scalar_lea.vmem [#allocation4], %s131
        // Predicated region
        $region25: #{tpu_custom_call.1} parent=23 // pred_check
          %p133 = pneg %p53
        $region26: #{tpu_custom_call.1} parent=23 // pred_check_branch
          %135 = sbr.rel (%p133) target = $region28
        $region27: #{tpu_custom_call.1} parent=23 // pred_region
          %136 = dma.done %s129, 2048
        $region28: #{tpu_custom_call.1} parent=23 // pred_fallthru
          _
        %s137 = sand.u32 %s40, 1
        %s138 = scalar_lea.sflag [#allocation5], %s137
        %s139 = sand.u32 %s40, 1
        %s140 = smul.addr %s139, 128
        %s141 = scalar_lea.vmem [#allocation4], %s140
        %p142 = pneg %p53
        %p143 = pneg %p50
        %p144 = pneg %p79
        %p145 = pneg %p76
        %s146 = sand.u32 %s66, 1
        %s147 = scalar_lea.sflag [#allocation6], %s146
        %s148 = sand.u32 %s66, 1
        %s149 = smul.addr %s148, 8
        %s150 = scalar_lea.vmem [#allocation7], %s149
        %s151 = smul.u32 16, %s23
        %p152 = scmp.eq.s32.totalorder %s23, 0
        // Predicated region
        $region29: #{tpu_custom_call.1} parent=23 // pred_check
          %p153 = pneg %p152
        $region30: #{tpu_custom_call.1} parent=23 // pred_check_branch
          %155 = sbr.rel (%p153) target = $region32
        $region31: #{tpu_custom_call.1} parent=23 // pred_region
          %156 = vst [vmem:[#allocation2] sm:$0xff] 0.0
          %157 = vst [vmem:[#allocation3] sm:$0xff] 0.0
        $region32: #{tpu_custom_call.1} parent=23 // pred_fallthru
          _
        %s158 = smul.u32 0, 8
        %s159 = scalar_lea.vmem %s132, %s158 [#allocation4]
        %v160 = vld [vmem:[%s159] sm:$0xff]
        %v161 = vld [vmem:[%s159 + $0x8] sm:$0xff]
        %v162 = vld [vmem:[%s159 + $0x10] sm:$0xff]
        %v163 = vld [vmem:[%s159 + $0x18] sm:$0xff]
        %v164 = vld [vmem:[%s159 + $0x20] sm:$0xff]
        %v165 = vld [vmem:[%s159 + $0x28] sm:$0xff]
        %v166 = vld [vmem:[%s159 + $0x30] sm:$0xff]
        %v167 = vld [vmem:[%s159 + $0x38] sm:$0xff]
        %v168 = vld [vmem:[#allocation2] sm:$0xff]
        %v169 = vadd.f32 %v160, %v161
        %v170 = vadd.f32 %v169, %v162
        %v171 = vadd.f32 %v170, %v163
        %v172 = vadd.f32 %v171, %v164
        %v173 = vadd.f32 %v172, %v165
        %v174 = vadd.f32 %v173, %v166
        %v175 = vadd.f32 %v174, %v167
        %v176 = vadd.f32 %v168, %v175
        %177 = vst [vmem:[#allocation2] sm:$0xff] %v176
        %v178 = vld [vmem:[#allocation3] sm:$0xff]
        %v179 = vmul.f32 %v160, %v160
        %v180 = vmul.f32 %v161, %v161
        %v181 = vmul.f32 %v162, %v162
        %v182 = vmul.f32 %v163, %v163
        %v183 = vmul.f32 %v164, %v164
        %v184 = vmul.f32 %v165, %v165
        %v185 = vmul.f32 %v166, %v166
        %v186 = vmul.f32 %v167, %v167
        %v187 = vadd.f32 %v179, %v180
        %v188 = vadd.f32 %v187, %v181
        %v189 = vadd.f32 %v188, %v182
        %v190 = vadd.f32 %v189, %v183
        %v191 = vadd.f32 %v190, %v184
        %v192 = vadd.f32 %v191, %v185
        %v193 = vadd.f32 %v192, %v186
        %v194 = vadd.f32 %v178, %v193
        %195 = vst [vmem:[#allocation3] sm:$0xff] %v194
        %s196 = smul.u32 8, 8
        %s197 = scalar_lea.vmem %s132, %s196 [#allocation4]
        %v198 = vld [vmem:[%s197] sm:$0xff]
        %v199 = vld [vmem:[%s197 + $0x8] sm:$0xff]
        %v200 = vld [vmem:[%s197 + $0x10] sm:$0xff]
        %v201 = vld [vmem:[%s197 + $0x18] sm:$0xff]
        %v202 = vld [vmem:[%s197 + $0x20] sm:$0xff]
        %v203 = vld [vmem:[%s197 + $0x28] sm:$0xff]
        %v204 = vld [vmem:[%s197 + $0x30] sm:$0xff]
        %v205 = vld [vmem:[%s197 + $0x38] sm:$0xff]
        %v206 = vld [vmem:[#allocation2] sm:$0xff]
        %v207 = vadd.f32 %v198, %v199
        %v208 = vadd.f32 %v207, %v200
        %v209 = vadd.f32 %v208, %v201
        %v210 = vadd.f32 %v209, %v202
        %v211 = vadd.f32 %v210, %v203
        %v212 = vadd.f32 %v211, %v204
        %v213 = vadd.f32 %v212, %v205
        %v214 = vadd.f32 %v206, %v213
        %215 = vst [vmem:[#allocation2] sm:$0xff] %v214
        %v216 = vld [vmem:[#allocation3] sm:$0xff]
        %v217 = vmul.f32 %v198, %v198
        %v218 = vmul.f32 %v199, %v199
        %v219 = vmul.f32 %v200, %v200
        %v220 = vmul.f32 %v201, %v201
        %v221 = vmul.f32 %v202, %v202
        %v222 = vmul.f32 %v203, %v203
        %v223 = vmul.f32 %v204, %v204
        %v224 = vmul.f32 %v205, %v205
        %v225 = vadd.f32 %v217, %v218
        %v226 = vadd.f32 %v225, %v219
        %v227 = vadd.f32 %v226, %v220
        %v228 = vadd.f32 %v227, %v221
        %v229 = vadd.f32 %v228, %v222
        %v230 = vadd.f32 %v229, %v223
        %v231 = vadd.f32 %v230, %v224
        %v232 = vadd.f32 %v216, %v231
        %233 = vst [vmem:[#allocation3] sm:$0xff] %v232
        %p234 = scmp.eq.s32.totalorder %s23, 1
        // Predicated region
        $region33: #{tpu_custom_call.1} parent=23 // pred_check
          %p235 = pneg %p234
        $region34: #{tpu_custom_call.1} parent=23 // pred_check_branch
          %237 = sbr.rel (%p235) target = $region36
        $region35: #{tpu_custom_call.1} parent=23 // pred_region
          %v238 = vld [vmem:[#allocation2] sm:$0xff]
          %v239 = vld [vmem:[#allocation3] sm:$0xff]
          %v240 = vmul.f32 %v238, 0.03125
          %v241 = vrsqrt.pop %v240
          %v242 = vmul.f32 %v240, %v241
          %vm243 = vcmp.eq.f32.partialorder %v240, inf
          %v244 = vsel %vm243, %v240, %v242
          %vm245 = vcmp.eq.f32.partialorder %v240, 0.0
          %v246 = vand.u32 %v240, 2147483648
          %v247 = vsel %vm245, %v246, %v244
          %248 = vadd.xlane.f32.xlu0 %v247
          %v249 = vpop.xlane.xlu0 %248
          %v250 = vrcp.pop %v249
          %v251 = vmul.f32 %v247, %v250
          %v252 = vmul.f32 %v251, %v251
          %253 = vadd.xlane.f32.xlu0 %v252
          %v254 = vpop.xlane.xlu0 %253
          %v255 = vrot.slane %v254, 4
          %v256 = vadd.f32 %v254, %v255
          %v257 = vrot.slane %v256, 2
          %v258 = vadd.f32 %v256, %v257
          %v259 = vrot.slane %v258, 1
          %v260 = vadd.f32 %v258, %v259
          %s261 = vtos %v260
          %s262 = smul.f32 %s261, 32.0
          %v263 = vmul.f32 %v251, %v238
          %264 = vadd.xlane.f32.xlu0 %v263
          %v265 = vpop.xlane.xlu0 %264
          %v266 = vrot.slane %v265, 4
          %v267 = vadd.f32 %v265, %v266
          %v268 = vrot.slane %v267, 2
          %v269 = vadd.f32 %v267, %v268
          %v270 = vrot.slane %v269, 1
          %v271 = vadd.f32 %v269, %v270
          %s272 = vtos %v271
          %s273 = smul.f32 %s272, 2.0
          %s274 = ssub.f32 %s262, %s273
          %275 = vadd.xlane.f32.xlu0 %v239
          %v276 = vpop.xlane.xlu0 %275
          %v277 = vrot.slane %v276, 4
          %v278 = vadd.f32 %v276, %v277
          %v279 = vrot.slane %v278, 2
          %v280 = vadd.f32 %v278, %v279
          %v281 = vrot.slane %v280, 1
          %v282 = vadd.f32 %v280, %v281
          %s283 = vtos %v282
          %s284 = sadd.f32 %s274, %s283
          %v285 = vstv %s284
          %286 = vst [vmem:[%s150] sm:$0xff] %v285
        $region36: #{tpu_custom_call.1} parent=23 // pred_fallthru
          _
        %s287 = sand.u32 %s66, 1
        %s288 = scalar_lea.sflag [#allocation6], %s287
        %s289 = sand.u32 %s66, 1
        %s290 = smul.addr %s289, 8
        %s291 = scalar_lea.vmem [#allocation7], %s290
        // Predicated region
        $region37: #{tpu_custom_call.1} parent=23 // pred_check
          %p292 = pneg %p76
        $region38: #{tpu_custom_call.1} parent=23 // pred_check_branch
          %294 = sbr.rel (%p292) target = $region40
        $region39: #{tpu_custom_call.1} parent=23 // pred_region
          %s296 = ssub.s32 128, 128
          %297 = vsyncadd %s288, %s296
          %s298 = smul.addr %s22, 128
          %s299 = scalar_lea.hbm %s1, %s298
          %s301 = sshll.u32 %s291, 4
          %s302 = int_to_ptr.vmem [resolvable:$true] %s301
          %304 = dma.vmem_to_hbm [thread:$0]  %s302, 128, %s299, %s288
        $region40: #{tpu_custom_call.1} parent=23 // pred_fallthru
          _
      $region24: #{tpu_custom_call.1} parent=5 // pred_fallthru
        _
      %p305 = scmp.le.s32.totalorder 2, %s13
      // Predicated region
      $region41: #{tpu_custom_call.1} parent=5 // pred_check
        %p306 = pneg %p305
      $region42: #{tpu_custom_call.1} parent=5 // pred_check_branch
        %308 = sbr.rel (%p306) target = $region44
      $region43: #{tpu_custom_call.1} parent=5 // pred_region
        %s309 = ssub.s32 %s13, 2
        // Predicated region
        $region45: #{tpu_custom_call.1} parent=43 // pred_check
          %p310 = pneg %p82
        $region46: #{tpu_custom_call.1} parent=43 // pred_check_branch
          %312 = sbr.rel (%p310) target = $region48
        $region47: #{tpu_custom_call.1} parent=43 // pred_region
          %s313 = sand.u32 %s67, 1
          %s314 = scalar_lea.sflag [#allocation6], %s313
          %s315 = sand.u32 %s67, 1
          %s316 = smul.addr %s315, 8
          %s317 = scalar_lea.vmem [#allocation7], %s316
          %318 = dma.done %s314, 128
        $region48: #{tpu_custom_call.1} parent=43 // pred_fallthru
          _
      $region44: #{tpu_custom_call.1} parent=5 // pred_fallthru
        _
    $region6: #{tpu_custom_call.1} parent=1 // loop_footer
      %s17 = sadd.s32 1, %s13
    $region7: #{tpu_custom_call.1} parent=1 // loop_footer_branch
      %12 = sbr.rel target = $region3
    $region8: #{tpu_custom_call.1} parent=1 // loop_exit
      _
    %319 = vsyncpa [#allocation5], 1
    %s320 = scalar_lea.sflag [#allocation5], 1
    %321 = vsyncpa %s320, 1
    %322 = vsyncpa [#allocation6], 1
    %s323 = scalar_lea.sflag [#allocation6], 1
    %324 = vsyncpa %s323, 1

</llo_original>
